<compile_context>
chip_gen: v5e
topology: v5e:2x2
jax: 0.10.0
libtpu: 0.0.40
codegen_flags: <defaults>
</compile_context>

<pallas_src>
import jax
import jax.numpy as jnp
from jax.experimental import pallas as pl
from jax.experimental.pallas import tpu as pltpu


# ----------------------------- Pallas kernel ------------------------------ #
def _lambda_kernel(x_ref, o_ref):
    # Elementwise lambda body: relu(x) * 2 + 1
    x = x_ref[...]
    o_ref[...] = jnp.maximum(x, 0.0) * 2.0 + 1.0


def _lambda_ref(x):
    # Pure-JAX reference of the same lambda (for correctness check).
    return jnp.maximum(x, 0.0) * 2.0 + 1.0


# ------------------------------- Wrapper ---------------------------------- #
def lambda_forward(x):
    """Apply the Lambda module (concrete lmdb = relu(x)*2+1) via Pallas."""
    orig_shape = x.shape
    orig_dtype = x.dtype
    n = x.size
    itemsize = jnp.dtype(orig_dtype).itemsize

    # ---- Lane-dense 2D layout, no extra HBM copy on the common path ----
    lanes = None
    for w in (1024, 512, 256, 128):
        if n % w == 0:
            lanes = w
            break
    if lanes is None:
        lanes = 128
    pad = (-n) % lanes

    flat = x.reshape(-1)
    if pad:
        # Rare ragged case (element count not a multiple of 128).
        flat = jnp.pad(flat, (0, pad))
    rows = flat.size // lanes
    x2d = flat.reshape(rows, lanes)

    # ---- Block sizing: ~2 MiB per buffer ----
    # 2 MiB * 2 buffers (input) + 2 MiB * 2 buffers (output) = 8 MiB total,
    # safely under the default scoped-VMEM limit on every TPU generation.
    target_tile_bytes = 2 * 1024 * 1024
    block_rows = max(8, (target_tile_bytes // (lanes * itemsize)) // 8 * 8)
    if block_rows >= rows:
        # Small input: single block covering the full array (block shape equal
        # to the full array dims is always legal).
        block_rows = rows
    grid = (pl.cdiv(rows, block_rows),)

    out2d = pl.pallas_call(
        _lambda_kernel,
        out_shape=jax.ShapeDtypeStruct((rows, lanes), orig_dtype),
        grid_spec=pltpu.PrefetchScalarGridSpec(
            num_scalar_prefetch=0,
            grid=grid,
            in_specs=[pl.BlockSpec((block_rows, lanes), lambda i: (i, 0))],
            out_specs=pl.BlockSpec((block_rows, lanes), lambda i: (i, 0)),
        ),
        compiler_params=pltpu.CompilerParams(
            dimension_semantics=("parallel",),
        ),
        cost_estimate=pl.CostEstimate(
            flops=2 * n,
            transcendentals=0,
            bytes_accessed=2 * n * itemsize,
        ),
    )(x2d)

    out_flat = out2d.reshape(-1)
    if pad:
        out_flat = out_flat[:n]
    return out_flat.reshape(orig_shape)


# --------------------------------- Main ------------------------------------ #
if __name__ == "__main__":
    key = jax.random.PRNGKey(0)
    # NCHW, small shapes: batch=2, channels=4, spatial=16x16
    x = jax.random.normal(key, (2, 4, 16, 16), dtype=jnp.float32)

    y = lambda_forward(x)
    y = jax.block_until_ready(y)

    y_ref = _lambda_ref(x)
    assert y.shape == x.shape
    assert y.dtype == x.dtype
    assert jnp.allclose(y, y_ref, atol=1e-6, rtol=1e-6), "mismatch vs reference"

    print("KERNEL_OK")
</pallas_src>

<mosaic_0001>
module attributes {stable_mosaic.version = 11 : i64} {
  func.func @_lambda_kernel(%arg0: i32, %arg1: memref<2x1024xf32, #tpu.memory_space<vmem>>, %arg2: memref<2x1024xf32, #tpu.memory_space<vmem>>) attributes {dimension_semantics = [#tpu.dimension_semantics<parallel>], iteration_bounds = array<i64: 1>, scalar_prefetch = 0 : i64, scratch_operands = 0 : i64, tpu.core_type = #tpu.core_type<tc>, window_params = [{transform_indices = @transform_0, window_bounds = array<i64: 2, 1024>}, {transform_indices = @transform_1, window_bounds = array<i64: 2, 1024>}]} {
    %c0 = arith.constant 0 : index
    %c0_0 = arith.constant 0 : index
    %0 = vector.load %arg1[%c0, %c0_0] : memref<2x1024xf32, #tpu.memory_space<vmem>>, vector<2x1024xf32>
    %cst = arith.constant 0.000000e+00 : f32
    %1 = vector.broadcast %cst : f32 to vector<2x1024xf32>
    %2 = arith.maximumf %0, %1 : vector<2x1024xf32>
    %cst_1 = arith.constant 2.000000e+00 : f32
    %3 = vector.broadcast %cst_1 : f32 to vector<2x1024xf32>
    %4 = arith.mulf %2, %3 : vector<2x1024xf32>
    %cst_2 = arith.constant 1.000000e+00 : f32
    %5 = vector.broadcast %cst_2 : f32 to vector<2x1024xf32>
    %6 = arith.addf %4, %5 : vector<2x1024xf32>
    %c0_3 = arith.constant 0 : index
    %c0_4 = arith.constant 0 : index
    %7 = vector.load %arg2[%c0_3, %c0_4] : memref<2x1024xf32, #tpu.memory_space<vmem>>, vector<2x1024xf32>
    tpu.vector_store %arg2[%c0_3, %c0_4], %6 {strides = array<i32>} : memref<2x1024xf32, #tpu.memory_space<vmem>>, vector<2x1024xf32>,
    return
  }
  func.func @transform_0(%arg0: i32) -> (i32, i32) {
    %c0_i32 = arith.constant 0 : i32
    %c0_i32_0 = arith.constant 0 : i32
    return %arg0, %c0_i32 : i32, i32
  }
  func.func @transform_1(%arg0: i32) -> (i32, i32) {
    %c0_i32 = arith.constant 0 : i32
    %c0_i32_0 = arith.constant 0 : i32
    return %arg0, %c0_i32 : i32, i32
  }
}

</mosaic_0001>

<llo_original>
// kernel: tpu_custom_call.1
$region0: #{tpu_custom_call.1}
  #allocation0 [shape = 'u32[]', space=smem, size = 0x4, offset = 0x4, fixed_abs, tag = 'smem constant byte address 0x4 - core index']
  #allocation1 [shape = 'u32[72,128]{1,0:T(1,128)}', space=vmem, size = 0x9000, scoped, tag = 'internal scratch']
  %s0 = inlined_call_operand.hbm [shape: f32[2,1024], index: 0, kind: input, shape index: {}]
  %s1 = inlined_call_operand.hbm [shape: f32[2,1024], index: 1, kind: output, shape index: {}]
  %s2 = sld [smem:[#allocation0]]
  $region18: #{tpu_custom_call.1} parent=0
    _
  %s4 = ssub.s32 1, %s2
  %s5 = scalar_select 0, %s4, %s2
  $region1: #{tpu_custom_call.1} parent=0
    #allocation2 [shape = 'u8[8192]{0}', space=vmem, size = 0x2000, scoped, tag = 'input window, operand 0, single buffered']
    #allocation3 [shape = 's32[1]{0}', space=sflag, size = 0x4, scoped, tag = 'scoped memory for tpu_custom_call.1']
    #allocation4 [shape = 's32[1]{0}', space=sflag, size = 0x4, scoped, tag = 'scoped memory for tpu_custom_call.1']
    #allocation5 [shape = 'u8[8192]{0}', space=vmem, size = 0x2000, scoped, tag = 'output window, operand 0, single buffered']
    %6 = vsyncpa [#allocation3], 0
    %7 = vsyncpa [#allocation4], 0
    // Predicated region
    $region2: #{tpu_custom_call.1} parent=1 // pred_check
      _
    $region3: #{tpu_custom_call.1} parent=1 // pred_check_branch
      %9 = sbr.rel (0) target = $region5
    $region4: #{tpu_custom_call.1} parent=1 // pred_region
      %11 = vsyncadd [#allocation3], 0
      %s13 = sshll.u32 %s0, 4
      %s14 = int_to_ptr.hbm [resolvable:$true] %s13
      %s15 = sshll.u32 [#allocation2], 4
      %s16 = int_to_ptr.vmem [resolvable:$true] %s15
      %18 = dma.hbm_to_vmem [thread:$0]  %s14, 256, %s16, [#allocation3]
    $region5: #{tpu_custom_call.1} parent=1 // pred_fallthru
      _
    // Predicated region
    $region6: #{tpu_custom_call.1} parent=1 // pred_check
      _
    $region7: #{tpu_custom_call.1} parent=1 // pred_check_branch
      %20 = sbr.rel (0) target = $region9
    $region8: #{tpu_custom_call.1} parent=1 // pred_region
      %22 = dma.done [#allocation3], 256
    $region9: #{tpu_custom_call.1} parent=1 // pred_fallthru
      _
    %v23 = vld [vmem:[#allocation2] sm:$0xff]
    %v24 = vld [vmem:[#allocation2 + $0x8] sm:$0xff]
    %v25 = vmax.f32 %v23, 0.0
    %v26 = vmax.f32 %v24, 0.0
    %v27 = vmul.f32 %v25, 2.0
    %v28 = vmul.f32 %v26, 2.0
    %v29 = vadd.f32 %v27, 1.0
    %v30 = vadd.f32 %v28, 1.0
    %31 = vst [vmem:[#allocation5] sm:$0xff] %v29
    %32 = vst [vmem:[#allocation5 + $0x8] sm:$0xff] %v30
    // Predicated region
    $region10: #{tpu_custom_call.1} parent=1 // pred_check
      _
    $region11: #{tpu_custom_call.1} parent=1 // pred_check_branch
      %34 = sbr.rel (0) target = $region13
    $region12: #{tpu_custom_call.1} parent=1 // pred_region
      %36 = vsyncadd [#allocation4], 0
      %s38 = sshll.u32 [#allocation5], 4
      %s39 = int_to_ptr.vmem [resolvable:$true] %s38
      %s40 = sshll.u32 %s1, 4
      %s41 = int_to_ptr.hbm [resolvable:$true] %s40
      %43 = dma.vmem_to_hbm [thread:$0]  %s39, 256, %s41, [#allocation4]
    $region13: #{tpu_custom_call.1} parent=1 // pred_fallthru
      _
    // Predicated region
    $region14: #{tpu_custom_call.1} parent=1 // pred_check
      _
    $region15: #{tpu_custom_call.1} parent=1 // pred_check_branch
      %45 = sbr.rel (0) target = $region17
    $region16: #{tpu_custom_call.1} parent=1 // pred_region
      %47 = dma.done [#allocation4], 256
    $region17: #{tpu_custom_call.1} parent=1 // pred_fallthru
      _
    %48 = vsyncpa [#allocation3], 1
    %49 = vsyncpa [#allocation4], 1

</llo_original>
